<compile_context>
chip_gen: v5e
topology: v5e:2x2
jax: 0.10.0
libtpu: 0.0.40
codegen_flags: <defaults>
</compile_context>

<pallas_src>
import functools

import jax
import jax.numpy as jnp
from jax.experimental import pallas as pl
from jax.experimental.pallas import tpu as pltpu

_LANE = 128     # lane width: feature dims are padded to a multiple of this
_SUBLANE = 8    # sublane width: row tiles are kept a multiple of this


def _round_up(x, m):
    return (x + m - 1) // m * m


def _device_kind():
    try:
        return jax.devices()[0].device_kind.lower()
    except Exception:
        return ""


def _num_tensorcores_hint():
    # v7x has 2 TensorCores per chip; v5e/v6e have 1.
    return 2 if "7" in _device_kind() else 1


def _vmem_budget_bytes():
    """Generation-aware VMEM budget with headroom for compiler scratch/semaphores.

    v7x: 64 MiB physical per TensorCore -> ~54 MiB budget.
    v5e/v6e: 128 MiB physical -> ~108 MiB budget.
    """
    if "7" in _device_kind():
        return 54 * 1024 * 1024
    try:
        cap = int(pltpu.get_tpu_info().vmem_capacity_bytes)
    except Exception:
        cap = 64 * 1024 * 1024
    return min(int(cap * 0.85), 108 * 1024 * 1024)


# --------------------------------------------------------------------------- #
# Kernel
# --------------------------------------------------------------------------- #
def _mlp_kernel(z_ref, w1_ref, b1_ref, w2_ref, b2_ref, w3_ref, b3_ref, o_ref):
    """Fused 3-layer MLP on one [tile_n, *] row block.

    Matmuls run on the MXU in the weights' compute dtype (bf16 by default) with
    f32 accumulation; the f32 -> compute-dtype casts, bias adds and ReLUs stay on
    the VPU (not the bottleneck); only the final store casts to the output dtype.
    """
    cdt = w1_ref.dtype  # compute dtype for the MXU operands

    x = z_ref[...].astype(cdt)
    h = jnp.dot(x, w1_ref[...], preferred_element_type=jnp.float32)
    h = jnp.maximum(h + b1_ref[...], 0.0)

    h = jnp.dot(h.astype(cdt), w2_ref[...], preferred_element_type=jnp.float32)
    h = jnp.maximum(h + b2_ref[...], 0.0)

    h = jnp.dot(h.astype(cdt), w3_ref[...], preferred_element_type=jnp.float32)
    o_ref[...] = (h + b3_ref[...]).astype(o_ref.dtype)


# --------------------------------------------------------------------------- #
# One-time parameter preparation (hoisted off the per-call path)
# --------------------------------------------------------------------------- #
def prepare_params(w1, b1, w2, b2, w3, b3, *, compute_dtype=jnp.bfloat16):
    """Convert PyTorch-layout nn.Linear params (W [out, in], b [out]) into
    TPU-friendly operands, once:
      * transpose to [in, out] so the kernel computes x @ W + b (== x @ W_pt.T + b),
      * zero-pad feature dims to lane (128) multiples so every block is lane-dense,
      * cast weights to the MXU compute dtype; biases stay f32 for the VPU add.
    Zero padding is semantics-preserving through ReLU; padded output columns stay 0.
    Returns (padded_params_tuple, out_dim).
    """
    cdt = jnp.dtype(compute_dtype)
    dim, e = w1.shape
    e_p = _round_up(e, _LANE)
    d_p = _round_up(dim, _LANE)

    def pad_w(w, rows, cols, r_p, c_p):
        wt = jnp.asarray(w).T.astype(cdt)  # [in, out]
        if (r_p, c_p) == (rows, cols):
            return wt
        return jnp.zeros((r_p, c_p), cdt).at[:rows, :cols].set(wt)

    def pad_b(b, cols, c_p):
        bb = jnp.asarray(b).reshape(1, -1).astype(jnp.float32)
        if c_p == cols:
            return bb
        return jnp.zeros((1, c_p), jnp.float32).at[:, :cols].set(bb)

    params = (pad_w(w1, e, dim, e_p, d_p), pad_b(b1, dim, d_p),
              pad_w(w2, dim, dim, d_p, d_p), pad_b(b2, dim, d_p),
              pad_w(w3, dim, dim, d_p, d_p), pad_b(b3, dim, d_p))
    return params, dim


# --------------------------------------------------------------------------- #
# Forward
# --------------------------------------------------------------------------- #
@functools.partial(jax.jit,
                   static_argnames=("out_dim", "tile_n", "single_buffer_weights"))
def translation_module_forward(z, padded_params, *, out_dim, tile_n=1024,
                               single_buffer_weights=True):
    """z: [N, embedding_dim] (any dtype; f32 typical). padded_params from prepare_params.

    Returns [N, out_dim] in z.dtype.
    """
    w1_p, b1_p, w2_p, b2_p, w3_p, b3_p = padded_params
    n, e = z.shape
    e_p, d_p = w1_p.shape

    out_dtype = z.dtype
    zbytes = jnp.dtype(z.dtype).itemsize
    obytes = jnp.dtype(out_dtype).itemsize
    cbytes = jnp.dtype(w1_p.dtype).itemsize

    budget = _vmem_budget_bytes()
    w_copies = 1 if single_buffer_weights else 2
    w_resident = w_copies * ((e_p * d_p + 2 * d_p * d_p) * cbytes + 3 * d_p * 4)

    def act_bytes(t):  # double-buffered z row tile + output row tile
        return 2 * t * (e_p * zbytes + d_p * obytes)

    # Largest sublane-aligned row tile <= tile_n that fits VMEM alongside weights.
    tn = _round_up(max(_SUBLANE, min(tile_n, _round_up(n, _SUBLANE))), _SUBLANE)
    while tn > _SUBLANE and w_resident + act_bytes(tn) > budget:
        tn = max(_SUBLANE, (tn // 2) // _SUBLANE * _SUBLANE)

    # v7x megacore: make sure there are >= 2 row tiles so both TensorCores get work.
    if (_num_tensorcores_hint() > 1 and _round_up(n, tn) // tn < 2
            and n >= 2 * _SUBLANE):
        tn = _round_up(-(-n // 2), _SUBLANE)

    n_p = _round_up(n, tn)
    grid = (n_p // tn,)

    # Pad activations only when actually required; the dtype cast happens in-kernel.
    if n_p != n or e_p != e:
        z_in = jnp.zeros((n_p, e_p), z.dtype).at[:n, :e].set(z)
    else:
        z_in = z

    vmem_limit = int(min(budget,
                         max(w_resident + act_bytes(tn) + (4 << 20), 32 << 20)))

    flops = 2 * n_p * d_p * (e_p + 2 * d_p)
    bytes_accessed = (n_p * e_p * zbytes
                      + (e_p * d_p + 2 * d_p * d_p) * cbytes
                      + 3 * d_p * 4
                      + n_p * d_p * obytes)

    def _wspec(shape):
        idx = lambda i, _s=shape: (0,) * len(_s)
        if single_buffer_weights:
            # Constant blocks never change across grid steps: single-buffer them
            # to halve their VMEM footprint (frees room for a bigger row tile).
            return pl.BlockSpec(shape, idx, pipeline_mode=pl.Buffered(1))
        return pl.BlockSpec(shape, idx)

    out_p = pl.pallas_call(
        _mlp_kernel,
        out_shape=jax.ShapeDtypeStruct((n_p, d_p), out_dtype),
        grid_spec=pltpu.PrefetchScalarGridSpec(
            num_scalar_prefetch=0,
            grid=grid,
            in_specs=[
                # activation tile: one lane-dense row block per grid step
                pl.BlockSpec((tn, e_p), lambda i: (i, 0)),
                # weights / biases: full (padded) arrays, constant block index so
                # the pipeline does not re-DMA them between grid steps
                _wspec((e_p, d_p)), _wspec((1, d_p)),
                _wspec((d_p, d_p)), _wspec((1, d_p)),
                _wspec((d_p, d_p)), _wspec((1, d_p)),
            ],
            out_specs=pl.BlockSpec((tn, d_p), lambda i: (i, 0)),
        ),
        compiler_params=pltpu.CompilerParams(
            dimension_semantics=("parallel",),
            vmem_limit_bytes=vmem_limit,
        ),
        cost_estimate=pl.CostEstimate(
            flops=flops, transcendentals=0, bytes_accessed=bytes_accessed),
    )(z_in, w1_p, b1_p, w2_p, b2_p, w3_p, b3_p)

    # Slice only the padding that was actually applied (avoid an extra output copy).
    if n_p == n and d_p == out_dim:
        return out_p
    if d_p == out_dim:
        return out_p[:n]
    return out_p[:n, :out_dim]


# --------------------------------------------------------------------------- #
# Reference + parameter init (PyTorch layout) + harness
# --------------------------------------------------------------------------- #
def init_params(key, dim, embedding_dim, dtype=jnp.float32):
    """Synthetic init mimicking nn.Linear: W [out, in], b [out], U(-1/sqrt(fan_in), +)."""
    ks = jax.random.split(key, 6)

    def linear(kw, kb, fan_in, fan_out):
        bound = 1.0 / float(fan_in) ** 0.5
        w = jax.random.uniform(kw, (fan_out, fan_in), dtype, -bound, bound)
        b = jax.random.uniform(kb, (fan_out,), dtype, -bound, bound)
        return w, b

    w1, b1 = linear(ks[0], ks[1], embedding_dim, dim)
    w2, b2 = linear(ks[2], ks[3], dim, dim)
    w3, b3 = linear(ks[4], ks[5], dim, dim)
    return w1, b1, w2, b2, w3, b3


def reference_forward(z, w1, b1, w2, b2, w3, b3):
    h = jnp.maximum(z @ w1.T + b1, 0.0)
    h = jnp.maximum(h @ w2.T + b2, 0.0)
    return h @ w3.T + b3


_BUFFERED_WEIGHTS_OK = True


def _run_forward(z, padded_params, out_dim, **kw):
    """Run the Pallas forward; if this jax version rejects pipeline_mode=pl.Buffered(1)
    for the constant weight blocks, fall back to default double-buffered blocks."""
    global _BUFFERED_WEIGHTS_OK
    if _BUFFERED_WEIGHTS_OK:
        try:
            return jax.block_until_ready(
                translation_module_forward(z, padded_params, out_dim=out_dim, **kw))
        except Exception:
            _BUFFERED_WEIGHTS_OK = False
    return jax.block_until_ready(
        translation_module_forward(z, padded_params, out_dim=out_dim,
                                   single_buffer_weights=False, **kw))


if __name__ == "__main__":
    root = jax.random.PRNGKey(0)
    k_in1, k_par1, k_in2, k_par2 = jax.random.split(root, 4)

    # ---- case 1: small shapes consistent with the module, bf16 MXU operands ----
    batch, embedding_dim, dim = 8, 32, 32
    z = jax.random.normal(k_in1, (batch, embedding_dim), dtype=jnp.float32)
    pt_params = init_params(k_par1, dim, embedding_dim)
    padded_params, out_dim = prepare_params(*pt_params, compute_dtype=jnp.bfloat16)

    out = _run_forward(z, padded_params, out_dim)
    ref = reference_forward(z, *pt_params)
    assert out.shape == (batch, dim)
    assert jnp.allclose(out, ref, atol=2e-2, rtol=2e-2), (
        f"mismatch vs reference: {float(jnp.max(jnp.abs(out - ref)))}")

    # ---- case 2: ragged batch + non-128 feature dims + multi-step grid,
    #              full-f32 compute path (precision-sensitive flows) -------------
    batch2, embedding_dim2, dim2 = 48, 40, 96
    z2 = jax.random.normal(k_in2, (batch2, embedding_dim2), dtype=jnp.float32)
    pt_params2 = init_params(k_par2, dim2, embedding_dim2)
    padded_params2, out_dim2 = prepare_params(*pt_params2, compute_dtype=jnp.float32)

    out2 = _run_forward(z2, padded_params2, out_dim2, tile_n=16)
    ref2 = reference_forward(z2, *pt_params2)
    assert out2.shape == (batch2, dim2)
    assert jnp.allclose(out2, ref2, atol=1e-4, rtol=1e-4), (
        f"mismatch vs reference (case 2): {float(jnp.max(jnp.abs(out2 - ref2)))}")

    print("KERNEL_OK")
</pallas_src>

<mosaic_0001>
module attributes {stable_mosaic.version = 11 : i64} {
  func.func @_mlp_kernel(%arg0: i32, %arg1: memref<8x128xf32, #tpu.memory_space<vmem>>, %arg2: memref<128x128xbf16, #tpu.memory_space<vmem>>, %arg3: memref<1x128xf32, #tpu.memory_space<vmem>>, %arg4: memref<128x128xbf16, #tpu.memory_space<vmem>>, %arg5: memref<1x128xf32, #tpu.memory_space<vmem>>, %arg6: memref<128x128xbf16, #tpu.memory_space<vmem>>, %arg7: memref<1x128xf32, #tpu.memory_space<vmem>>, %arg8: memref<8x128xf32, #tpu.memory_space<vmem>>) attributes {dimension_semantics = [#tpu.dimension_semantics<parallel>], iteration_bounds = array<i64: 1>, scalar_prefetch = 0 : i64, scratch_operands = 0 : i64, tpu.core_type = #tpu.core_type<tc>, window_params = [{transform_indices = @transform_0, window_bounds = array<i64: 8, 128>}, {pipeline_mode = #tpu.pipeline_mode<synchronous>, transform_indices = @transform_1, window_bounds = array<i64: 128, 128>}, {pipeline_mode = #tpu.pipeline_mode<synchronous>, transform_indices = @transform_2, window_bounds = array<i64: 1, 128>}, {pipeline_mode = #tpu.pipeline_mode<synchronous>, transform_indices = @transform_3, window_bounds = array<i64: 128, 128>}, {pipeline_mode = #tpu.pipeline_mode<synchronous>, transform_indices = @transform_4, window_bounds = array<i64: 1, 128>}, {pipeline_mode = #tpu.pipeline_mode<synchronous>, transform_indices = @transform_5, window_bounds = array<i64: 128, 128>}, {pipeline_mode = #tpu.pipeline_mode<synchronous>, transform_indices = @transform_6, window_bounds = array<i64: 1, 128>}, {transform_indices = @transform_7, window_bounds = array<i64: 8, 128>}]} {
    %c0 = arith.constant 0 : index
    %c0_0 = arith.constant 0 : index
    %0 = vector.load %arg1[%c0, %c0_0] : memref<8x128xf32, #tpu.memory_space<vmem>>, vector<8x128xf32>
    %1 = arith.truncf %0 : vector<8x128xf32> to vector<8x128xbf16>
    %c0_1 = arith.constant 0 : index
    %c0_2 = arith.constant 0 : index
    %2 = vector.load %arg2[%c0_1, %c0_2] : memref<128x128xbf16, #tpu.memory_space<vmem>>, vector<128x128xbf16>
    %cst = arith.constant dense<0.000000e+00> : vector<8x128xf32>
    %3 = tpu.matmul %1, %2, %cst {dimension_numbers = #tpu.dot_dimension_numbers<[1], [0], [0], [1], [0, 0, 1, 1], [], []>} : vector<8x128xbf16>, vector<128x128xbf16>, vector<8x128xf32> -> vector<8x128xf32>
    %c0_3 = arith.constant 0 : index
    %c0_4 = arith.constant 0 : index
    %4 = vector.load %arg3[%c0_3, %c0_4] : memref<1x128xf32, #tpu.memory_space<vmem>>, vector<1x128xf32>
    %5 = vector.broadcast %4 : vector<1x128xf32> to vector<8x128xf32>
    %6 = arith.addf %3, %5 : vector<8x128xf32>
    %cst_5 = arith.constant 0.000000e+00 : f32
    %7 = vector.broadcast %cst_5 : f32 to vector<8x128xf32>
    %8 = arith.maximumf %6, %7 : vector<8x128xf32>
    %9 = arith.truncf %8 : vector<8x128xf32> to vector<8x128xbf16>
    %c0_6 = arith.constant 0 : index
    %c0_7 = arith.constant 0 : index
    %10 = vector.load %arg4[%c0_6, %c0_7] : memref<128x128xbf16, #tpu.memory_space<vmem>>, vector<128x128xbf16>
    %cst_8 = arith.constant dense<0.000000e+00> : vector<8x128xf32>
    %11 = tpu.matmul %9, %10, %cst_8 {dimension_numbers = #tpu.dot_dimension_numbers<[1], [0], [0], [1], [0, 0, 1, 1], [], []>} : vector<8x128xbf16>, vector<128x128xbf16>, vector<8x128xf32> -> vector<8x128xf32>
    %c0_9 = arith.constant 0 : index
    %c0_10 = arith.constant 0 : index
    %12 = vector.load %arg5[%c0_9, %c0_10] : memref<1x128xf32, #tpu.memory_space<vmem>>, vector<1x128xf32>
    %13 = vector.broadcast %12 : vector<1x128xf32> to vector<8x128xf32>
    %14 = arith.addf %11, %13 : vector<8x128xf32>
    %cst_11 = arith.constant 0.000000e+00 : f32
    %15 = vector.broadcast %cst_11 : f32 to vector<8x128xf32>
    %16 = arith.maximumf %14, %15 : vector<8x128xf32>
    %17 = arith.truncf %16 : vector<8x128xf32> to vector<8x128xbf16>
    %c0_12 = arith.constant 0 : index
    %c0_13 = arith.constant 0 : index
    %18 = vector.load %arg6[%c0_12, %c0_13] : memref<128x128xbf16, #tpu.memory_space<vmem>>, vector<128x128xbf16>
    %cst_14 = arith.constant dense<0.000000e+00> : vector<8x128xf32>
    %19 = tpu.matmul %17, %18, %cst_14 {dimension_numbers = #tpu.dot_dimension_numbers<[1], [0], [0], [1], [0, 0, 1, 1], [], []>} : vector<8x128xbf16>, vector<128x128xbf16>, vector<8x128xf32> -> vector<8x128xf32>
    %c0_15 = arith.constant 0 : index
    %c0_16 = arith.constant 0 : index
    %20 = vector.load %arg7[%c0_15, %c0_16] : memref<1x128xf32, #tpu.memory_space<vmem>>, vector<1x128xf32>
    %21 = vector.broadcast %20 : vector<1x128xf32> to vector<8x128xf32>
    %22 = arith.addf %19, %21 : vector<8x128xf32>
    %c0_17 = arith.constant 0 : index
    %c0_18 = arith.constant 0 : index
    %23 = vector.load %arg8[%c0_17, %c0_18] : memref<8x128xf32, #tpu.memory_space<vmem>>, vector<8x128xf32>
    tpu.vector_store %arg8[%c0_17, %c0_18], %22 {strides = array<i32>} : memref<8x128xf32, #tpu.memory_space<vmem>>, vector<8x128xf32>,
    return
  }
  func.func @transform_0(%arg0: i32) -> (i32, i32) {
    %c0_i32 = arith.constant 0 : i32
    %c0_i32_0 = arith.constant 0 : i32
    return %arg0, %c0_i32 : i32, i32
  }
  func.func @transform_1(%arg0: i32) -> (i32, i32) {
    %c0_i32 = arith.constant 0 : i32
    %c0_i32_0 = arith.constant 0 : i32
    %c0_i32_1 = arith.constant 0 : i32
    return %c0_i32, %c0_i32_0 : i32, i32
  }
  func.func @transform_2(%arg0: i32) -> (i32, i32) {
    %c0_i32 = arith.constant 0 : i32
    %c0_i32_0 = arith.constant 0 : i32
    %c0_i32_1 = arith.constant 0 : i32
    return %c0_i32, %c0_i32_0 : i32, i32
  }
  func.func @transform_3(%arg0: i32) -> (i32, i32) {
    %c0_i32 = arith.constant 0 : i32
    %c0_i32_0 = arith.constant 0 : i32
    %c0_i32_1 = arith.constant 0 : i32
    return %c0_i32, %c0_i32_0 : i32, i32
  }
  func.func @transform_4(%arg0: i32) -> (i32, i32) {
    %c0_i32 = arith.constant 0 : i32
    %c0_i32_0 = arith.constant 0 : i32
    %c0_i32_1 = arith.constant 0 : i32
    return %c0_i32, %c0_i32_0 : i32, i32
  }
  func.func @transform_5(%arg0: i32) -> (i32, i32) {
    %c0_i32 = arith.constant 0 : i32
    %c0_i32_0 = arith.constant 0 : i32
    %c0_i32_1 = arith.constant 0 : i32
    return %c0_i32, %c0_i32_0 : i32, i32
  }
  func.func @transform_6(%arg0: i32) -> (i32, i32) {
    %c0_i32 = arith.constant 0 : i32
    %c0_i32_0 = arith.constant 0 : i32
    %c0_i32_1 = arith.constant 0 : i32
    return %c0_i32, %c0_i32_0 : i32, i32
  }
  func.func @transform_7(%arg0: i32) -> (i32, i32) {
    %c0_i32 = arith.constant 0 : i32
    %c0_i32_0 = arith.constant 0 : i32
    return %arg0, %c0_i32 : i32, i32
  }
}

module attributes {stable_mosaic.version = 11 : i64} {
  func.func @_mlp_kernel(%arg0: i32, %arg1: memref<8x128xf32, #tpu.memory_space<vmem>>, %arg2: memref<128x128xbf16, #tpu.memory_space<vmem>>, %arg3: memref<1x128xf32, #tpu.memory_space<vmem>>, %arg4: memref<128x128xbf16, #tpu.memory_space<vmem>>, %arg5: memref<1x128xf32, #tpu.memory_space<vmem>>, %arg6: memref<128x128xbf16, #tpu.memory_space<vmem>>, %arg7: memref<1x128xf32, #tpu.memory_space<vmem>>, %arg8: memref<8x128xf32, #tpu.memory_space<vmem>>) attributes {dimension_semantics = [#tpu.dimension_semantics<parallel>], iteration_bounds = array<i64: 1>, scalar_prefetch = 0 : i64, scratch_operands = 0 : i64, tpu.core_type = #tpu.core_type<tc>, window_params = [{transform_indices = @transform_0, window_bounds = array<i64: 8, 128>}, {pipeline_mode = #tpu.pipeline_mode<synchronous>, transform_indices = @transform_1, window_bounds = array<i64: 128, 128>}, {pipeline_mode = #tpu.pipeline_mode<synchronous>, transform_indices = @transform_2, window_bounds = array<i64: 1, 128>}, {pipeline_mode = #tpu.pipeline_mode<synchronous>, transform_indices = @transform_3, window_bounds = array<i64: 128, 128>}, {pipeline_mode = #tpu.pipeline_mode<synchronous>, transform_indices = @transform_4, window_bounds = array<i64: 1, 128>}, {pipeline_mode = #tpu.pipeline_mode<synchronous>, transform_indices = @transform_5, window_bounds = array<i64: 128, 128>}, {pipeline_mode = #tpu.pipeline_mode<synchronous>, transform_indices = @transform_6, window_bounds = array<i64: 1, 128>}, {transform_indices = @transform_7, window_bounds = array<i64: 8, 128>}]} {
    %c0 = arith.constant 0 : index
    %c0_0 = arith.constant 0 : index
    %0 = vector.load %arg1[%c0, %c0_0] : memref<8x128xf32, #tpu.memory_space<vmem>>, vector<8x128xf32>
    %1 = arith.truncf %0 : vector<8x128xf32> to vector<8x128xbf16>
    %c0_1 = arith.constant 0 : index
    %c0_2 = arith.constant 0 : index
    %2 = vector.load %arg2[%c0_1, %c0_2] : memref<128x128xbf16, #tpu.memory_space<vmem>>, vector<128x128xbf16>
    %cst = arith.constant dense<0.000000e+00> : vector<8x128xf32>
    %3 = tpu.matmul %1, %2, %cst {dimension_numbers = #tpu.dot_dimension_numbers<[1], [0], [0], [1], [0, 0, 1, 1], [], []>} : vector<8x128xbf16>, vector<128x128xbf16>, vector<8x128xf32> -> vector<8x128xf32>
    %c0_3 = arith.constant 0 : index
    %c0_4 = arith.constant 0 : index
    %4 = vector.load %arg3[%c0_3, %c0_4] : memref<1x128xf32, #tpu.memory_space<vmem>>, vector<1x128xf32>
    %5 = vector.broadcast %4 : vector<1x128xf32> to vector<8x128xf32>
    %6 = arith.addf %3, %5 : vector<8x128xf32>
    %cst_5 = arith.constant 0.000000e+00 : f32
    %7 = vector.broadcast %cst_5 : f32 to vector<8x128xf32>
    %8 = arith.maximumf %6, %7 : vector<8x128xf32>
    %9 = arith.truncf %8 : vector<8x128xf32> to vector<8x128xbf16>
    %c0_6 = arith.constant 0 : index
    %c0_7 = arith.constant 0 : index
    %10 = vector.load %arg4[%c0_6, %c0_7] : memref<128x128xbf16, #tpu.memory_space<vmem>>, vector<128x128xbf16>
    %cst_8 = arith.constant dense<0.000000e+00> : vector<8x128xf32>
    %11 = tpu.matmul %9, %10, %cst_8 {dimension_numbers = #tpu.dot_dimension_numbers<[1], [0], [0], [1], [0, 0, 1, 1], [], []>} : vector<8x128xbf16>, vector<128x128xbf16>, vector<8x128xf32> -> vector<8x128xf32>
    %c0_9 = arith.constant 0 : index
    %c0_10 = arith.constant 0 : index
    %12 = vector.load %arg5[%c0_9, %c0_10] : memref<1x128xf32, #tpu.memory_space<vmem>>, vector<1x128xf32>
    %13 = vector.broadcast %12 : vector<1x128xf32> to vector<8x128xf32>
    %14 = arith.addf %11, %13 : vector<8x128xf32>
    %cst_11 = arith.constant 0.000000e+00 : f32
    %15 = vector.broadcast %cst_11 : f32 to vector<8x128xf32>
    %16 = arith.maximumf %14, %15 : vector<8x128xf32>
    %17 = arith.truncf %16 : vector<8x128xf32> to vector<8x128xbf16>
    %c0_12 = arith.constant 0 : index
    %c0_13 = arith.constant 0 : index
    %18 = vector.load %arg6[%c0_12, %c0_13] : memref<128x128xbf16, #tpu.memory_space<vmem>>, vector<128x128xbf16>
    %cst_14 = arith.constant dense<0.000000e+00> : vector<8x128xf32>
    %19 = tpu.matmul %17, %18, %cst_14 {dimension_numbers = #tpu.dot_dimension_numbers<[1], [0], [0], [1], [0, 0, 1, 1], [], []>} : vector<8x128xbf16>, vector<128x128xbf16>, vector<8x128xf32> -> vector<8x128xf32>
    %c0_15 = arith.constant 0 : index
    %c0_16 = arith.constant 0 : index
    %20 = vector.load %arg7[%c0_15, %c0_16] : memref<1x128xf32, #tpu.memory_space<vmem>>, vector<1x128xf32>
    %21 = vector.broadcast %20 : vector<1x128xf32> to vector<8x128xf32>
    %22 = arith.addf %19, %21 : vector<8x128xf32>
    %c0_17 = arith.constant 0 : index
    %c0_18 = arith.constant 0 : index
    %23 = vector.load %arg8[%c0_17, %c0_18] : memref<8x128xf32, #tpu.memory_space<vmem>>, vector<8x128xf32>
    tpu.vector_store %arg8[%c0_17, %c0_18], %22 {strides = array<i32>} : memref<8x128xf32, #tpu.memory_space<vmem>>, vector<8x128xf32>,
    return
  }
  func.func @transform_0(%arg0: i32) -> (i32, i32) {
    %c0_i32 = arith.constant 0 : i32
    %c0_i32_0 = arith.constant 0 : i32
    return %arg0, %c0_i32 : i32, i32
  }
  func.func @transform_1(%arg0: i32) -> (i32, i32) {
    %c0_i32 = arith.constant 0 : i32
    %c0_i32_0 = arith.constant 0 : i32
    %c0_i32_1 = arith.constant 0 : i32
    return %c0_i32, %c0_i32_0 : i32, i32
  }
  func.func @transform_2(%arg0: i32) -> (i32, i32) {
    %c0_i32 = arith.constant 0 : i32
    %c0_i32_0 = arith.constant 0 : i32
    %c0_i32_1 = arith.constant 0 : i32
    return %c0_i32, %c0_i32_0 : i32, i32
  }
  func.func @transform_3(%arg0: i32) -> (i32, i32) {
    %c0_i32 = arith.constant 0 : i32
    %c0_i32_0 = arith.constant 0 : i32
    %c0_i32_1 = arith.constant 0 : i32
    return %c0_i32, %c0_i32_0 : i32, i32
  }
  func.func @transform_4(%arg0: i32) -> (i32, i32) {
    %c0_i32 = arith.constant 0 : i32
    %c0_i32_0 = arith.constant 0 : i32
    %c0_i32_1 = arith.constant 0 : i32
    return %c0_i32, %c0_i32_0 : i32, i32
  }
  func.func @transform_5(%arg0: i32) -> (i32, i32) {
    %c0_i32 = arith.constant 0 : i32
    %c0_i32_0 = arith.constant 0 : i32
    %c0_i32_1 = arith.constant 0 : i32
    return %c0_i32, %c0_i32_0 : i32, i32
  }
  func.func @transform_6(%arg0: i32) -> (i32, i32) {
    %c0_i32 = arith.constant 0 : i32
    %c0_i32_0 = arith.constant 0 : i32
    %c0_i32_1 = arith.constant 0 : i32
    return %c0_i32, %c0_i32_0 : i32, i32
  }
  func.func @transform_7(%arg0: i32) -> (i32, i32) {
    %c0_i32 = arith.constant 0 : i32
    %c0_i32_0 = arith.constant 0 : i32
    return %arg0, %c0_i32 : i32, i32
  }
}

</mosaic_0001>

<llo_original>
// kernel: translation_module_forward.1
$region0: #{translation_module_forward.1}
  #allocation0 [shape = 'u32[]', space=smem, size = 0x4, offset = 0x4, fixed_abs, tag = 'smem constant byte address 0x4 - core index']
  #allocation1 [shape = 'u32[72,128]{1,0:T(1,128)}', space=vmem, size = 0x9000, scoped, tag = 'internal scratch']
  %s0 = inlined_call_operand.vmem [shape: f32[8,128], index: 0, kind: input, shape index: {}]
  %s1 = inlined_call_operand.hbm [shape: bf16[128,128], index: 1, kind: input, shape index: {}]
  %s2 = inlined_call_operand.vmem [shape: f32[1,128], index: 2, kind: input, shape index: {}]
  %s3 = inlined_call_operand.hbm [shape: bf16[128,128], index: 3, kind: input, shape index: {}]
  %s4 = inlined_call_operand.vmem [shape: f32[1,128], index: 4, kind: input, shape index: {}]
  %s5 = inlined_call_operand.hbm [shape: bf16[128,128], index: 5, kind: input, shape index: {}]
  %s6 = inlined_call_operand.vmem [shape: f32[1,128], index: 6, kind: input, shape index: {}]
  %s7 = inlined_call_operand.hbm [shape: f32[8,128], index: 7, kind: output, shape index: {}]
  %s8 = sld [smem:[#allocation0]]
  $region50: #{translation_module_forward.1} parent=0
    _
  %s10 = ssub.s32 1, %s8
  %s11 = scalar_select 0, %s10, %s8
  $region1: #{translation_module_forward.1} parent=0
    #allocation2 [shape = 'u8[32768]{0}', space=vmem, size = 0x8000, scoped, tag = 'input window, operand 1, single buffered']
    #allocation3 [shape = 's32[1]{0}', space=sflag, size = 0x4, scoped, tag = 'scoped memory for translation_module_forward.1']
    #allocation4 [shape = 's32[1]{0}', space=sflag, size = 0x4, scoped, tag = 'scoped memory for translation_module_forward.1']
    #allocation5 [shape = 'u8[32768]{0}', space=vmem, size = 0x8000, scoped, tag = 'input window, operand 3, single buffered']
    #allocation6 [shape = 's32[1]{0}', space=sflag, size = 0x4, scoped, tag = 'scoped memory for translation_module_forward.1']
    #allocation7 [shape = 'u8[32768]{0}', space=vmem, size = 0x8000, scoped, tag = 'input window, operand 5, single buffered']
    #allocation8 [shape = 'u8[4096]{0}', space=vmem, size = 0x1000, scoped, tag = 'output window, operand 0, single buffered']
    %12 = vsyncpa [#allocation3], 0
    %13 = vsyncpa [#allocation6], 0
    %14 = vsyncpa [#allocation4], 0
    // Predicated region
    $region2: #{translation_module_forward.1} parent=1 // pred_check
      _
    $region3: #{translation_module_forward.1} parent=1 // pred_check_branch
      %16 = sbr.rel (0) target = $region5
    $region4: #{translation_module_forward.1} parent=1 // pred_region
      _
    $region5: #{translation_module_forward.1} parent=1 // pred_fallthru
      _
    // Predicated region
    $region6: #{translation_module_forward.1} parent=1 // pred_check
      _
    $region7: #{translation_module_forward.1} parent=1 // pred_check_branch
      %18 = sbr.rel (0) target = $region9
    $region8: #{translation_module_forward.1} parent=1 // pred_region
      %20 = vsyncadd [#allocation3], 0
      %s21 = sshll.u32 %s1, 4
      %s22 = int_to_ptr.hbm [resolvable:$true] %s21
      %s23 = sshll.u32 [#allocation2], 4
      %s24 = int_to_ptr.vmem [resolvable:$true] %s23
      %29 = dma.hbm_to_vmem [thread:$0]  %s22, 1024, %s24, [#allocation3], 64, 64, 4
    $region9: #{translation_module_forward.1} parent=1 // pred_fallthru
      _
    // Predicated region
    $region10: #{translation_module_forward.1} parent=1 // pred_check
      _
    $region11: #{translation_module_forward.1} parent=1 // pred_check_branch
      %31 = sbr.rel (0) target = $region13
    $region12: #{translation_module_forward.1} parent=1 // pred_region
      _
    $region13: #{translation_module_forward.1} parent=1 // pred_fallthru
      _
    // Predicated region
    $region14: #{translation_module_forward.1} parent=1 // pred_check
      _
    $region15: #{translation_module_forward.1} parent=1 // pred_check_branch
      %33 = sbr.rel (0) target = $region17
    $region16: #{translation_module_forward.1} parent=1 // pred_region
      %35 = vsyncadd [#allocation6], 0
      %s36 = sshll.u32 %s3, 4
      %s37 = int_to_ptr.hbm [resolvable:$true] %s36
      %s38 = sshll.u32 [#allocation5], 4
      %s39 = int_to_ptr.vmem [resolvable:$true] %s38
      %44 = dma.hbm_to_vmem [thread:$0]  %s37, 1024, %s39, [#allocation6], 64, 64, 4
    $region17: #{translation_module_forward.1} parent=1 // pred_fallthru
      _
    // Predicated region
    $region18: #{translation_module_forward.1} parent=1 // pred_check
      _
    $region19: #{translation_module_forward.1} parent=1 // pred_check_branch
      %46 = sbr.rel (0) target = $region21
    $region20: #{translation_module_forward.1} parent=1 // pred_region
      _
    $region21: #{translation_module_forward.1} parent=1 // pred_fallthru
      _
    // Predicated region
    $region22: #{translation_module_forward.1} parent=1 // pred_check
      _
    $region23: #{translation_module_forward.1} parent=1 // pred_check_branch
      %48 = sbr.rel (0) target = $region25
    $region24: #{translation_module_forward.1} parent=1 // pred_region
      %50 = vsyncadd [#allocation6], 0
      %s51 = sshll.u32 %s5, 4
      %s52 = int_to_ptr.hbm [resolvable:$true] %s51
      %s53 = sshll.u32 [#allocation7], 4
      %s54 = int_to_ptr.vmem [resolvable:$true] %s53
      %59 = dma.hbm_to_vmem [thread:$0]  %s52, 1024, %s54, [#allocation6], 64, 64, 4
    $region25: #{translation_module_forward.1} parent=1 // pred_fallthru
      _
    // Predicated region
    $region26: #{translation_module_forward.1} parent=1 // pred_check
      _
    $region27: #{translation_module_forward.1} parent=1 // pred_check_branch
      %61 = sbr.rel (0) target = $region29
    $region28: #{translation_module_forward.1} parent=1 // pred_region
      _
    $region29: #{translation_module_forward.1} parent=1 // pred_fallthru
      _
    // Predicated region
    $region30: #{translation_module_forward.1} parent=1 // pred_check
      _
    $region31: #{translation_module_forward.1} parent=1 // pred_check_branch
      %63 = sbr.rel (0) target = $region33
    $region32: #{translation_module_forward.1} parent=1 // pred_region
      %65 = dma.done [#allocation3], 1024
    $region33: #{translation_module_forward.1} parent=1 // pred_fallthru
      _
    // Predicated region
    $region34: #{translation_module_forward.1} parent=1 // pred_check
      _
    $region35: #{translation_module_forward.1} parent=1 // pred_check_branch
      %67 = sbr.rel (0) target = $region37
    $region36: #{translation_module_forward.1} parent=1 // pred_region
      %69 = dma.done [#allocation6], 1024
    $region37: #{translation_module_forward.1} parent=1 // pred_fallthru
      _
    // Predicated region
    $region38: #{translation_module_forward.1} parent=1 // pred_check
      _
    $region39: #{translation_module_forward.1} parent=1 // pred_check_branch
      %71 = sbr.rel (0) target = $region41
    $region40: #{translation_module_forward.1} parent=1 // pred_region
      %73 = dma.done [#allocation6], 1024
    $region41: #{translation_module_forward.1} parent=1 // pred_fallthru
      _
    %v74 = vld [vmem:[%s0] sm:$0xff]
    %v75 = vpack.c.bf16 %v74, %v74
    %v76 = vld [vmem:[#allocation2] sm:$0xf]
    %v77 = vld [vmem:[#allocation2 + $0x4] sm:$0xf]
    %v78 = vld [vmem:[#allocation2 + $0x8] sm:$0xf]
    %v79 = vld [vmem:[#allocation2 + $0xc] sm:$0xf]
    %v80 = vld [vmem:[#allocation2 + $0x10] sm:$0xf]
    %v81 = vld [vmem:[#allocation2 + $0x14] sm:$0xf]
    %v82 = vld [vmem:[#allocation2 + $0x18] sm:$0xf]
    %v83 = vld [vmem:[#allocation2 + $0x1c] sm:$0xf]
    %v84 = vld [vmem:[#allocation2 + $0x20] sm:$0xf]
    %v85 = vld [vmem:[#allocation2 + $0x24] sm:$0xf]
    %v86 = vld [vmem:[#allocation2 + $0x28] sm:$0xf]
    %v87 = vld [vmem:[#allocation2 + $0x2c] sm:$0xf]
    %v88 = vld [vmem:[#allocation2 + $0x30] sm:$0xf]
    %v89 = vld [vmem:[#allocation2 + $0x34] sm:$0xf]
    %v90 = vld [vmem:[#allocation2 + $0x38] sm:$0xf]
    %v91 = vld [vmem:[#allocation2 + $0x3c] sm:$0xf]
    %v92 = vld [vmem:[%s2] sm:$0x1]
    %v94 = vperm.slane %v92, 0
    %v112 = vunpack.c.l.b16 %v76
    %v113 = vunpack.c.l.b16 %v77
    %v114 = vunpack.c.l.b16 %v78
    %v115 = vunpack.c.l.b16 %v79
    %v116 = vunpack.c.l.b16 %v80
    %v117 = vunpack.c.l.b16 %v81
    %v118 = vunpack.c.l.b16 %v82
    %v119 = vunpack.c.l.b16 %v83
    %v120 = vunpack.c.l.b16 %v84
    %v121 = vunpack.c.l.b16 %v85
    %v122 = vunpack.c.l.b16 %v86
    %v123 = vunpack.c.l.b16 %v87
    %v124 = vunpack.c.l.b16 %v88
    %v125 = vunpack.c.l.b16 %v89
    %v126 = vunpack.c.l.b16 %v90
    %v127 = vunpack.c.l.b16 %v91
    %v128 = vpack.c.b16 %v113, %v112
    %v129 = vpack.c.b16 %v115, %v114
    %v130 = vpack.c.b16 %v117, %v116
    %v131 = vpack.c.b16 %v119, %v118
    %v132 = vpack.c.b16 %v121, %v120
    %v133 = vpack.c.b16 %v123, %v122
    %v134 = vpack.c.b16 %v125, %v124
    %v135 = vpack.c.b16 %v127, %v126
    %144 = vmatpush.bf16.msra.mxu0 %v135
    %145 = vmatpush.bf16.msra.mxu0 %v134
    %146 = vmatpush.bf16.msra.mxu0 %v133
    %147 = vmatpush.bf16.msra.mxu0 %v132
    %148 = vmatpush.bf16.msra.mxu0 %v131
    %149 = vmatpush.bf16.msra.mxu0 %v130
    %150 = vmatpush.bf16.msra.mxu0 %v129
    %151 = vmatpush.bf16.msra.mxu0 %v128
    %152 = vmatmul.bf16.gmra.mxu0 %v75
    %v153 = vpop.f32.mrf.mxu0
    %v154 = vadd.f32 %v94, %v153
    %v155 = vpop.f32.mrf.mxu0
    %156 = vdwg.mxu0
    %v157 = vmax.f32 %v154, 0.0
    %v158 = vpack.c.bf16 %v157, %v157
    %v159 = vld [vmem:[#allocation5] sm:$0xf]
    %v160 = vld [vmem:[#allocation5 + $0x4] sm:$0xf]
    %v161 = vld [vmem:[#allocation5 + $0x8] sm:$0xf]
    %v162 = vld [vmem:[#allocation5 + $0xc] sm:$0xf]
    %v163 = vld [vmem:[#allocation5 + $0x10] sm:$0xf]
    %v164 = vld [vmem:[#allocation5 + $0x14] sm:$0xf]
    %v165 = vld [vmem:[#allocation5 + $0x18] sm:$0xf]
    %v166 = vld [vmem:[#allocation5 + $0x1c] sm:$0xf]
    %v167 = vld [vmem:[#allocation5 + $0x20] sm:$0xf]
    %v168 = vld [vmem:[#allocation5 + $0x24] sm:$0xf]
    %v169 = vld [vmem:[#allocation5 + $0x28] sm:$0xf]
    %v170 = vld [vmem:[#allocation5 + $0x2c] sm:$0xf]
    %v171 = vld [vmem:[#allocation5 + $0x30] sm:$0xf]
    %v172 = vld [vmem:[#allocation5 + $0x34] sm:$0xf]
    %v173 = vld [vmem:[#allocation5 + $0x38] sm:$0xf]
    %v174 = vld [vmem:[#allocation5 + $0x3c] sm:$0xf]
    %v175 = vld [vmem:[%s4] sm:$0x1]
    %v177 = vperm.slane %v175, 0
    %v195 = vunpack.c.l.b16 %v159
    %v196 = vunpack.c.l.b16 %v160
    %v197 = vunpack.c.l.b16 %v161
    %v198 = vunpack.c.l.b16 %v162
    %v199 = vunpack.c.l.b16 %v163
    %v200 = vunpack.c.l.b16 %v164
    %v201 = vunpack.c.l.b16 %v165
    %v202 = vunpack.c.l.b16 %v166
    %v203 = vunpack.c.l.b16 %v167
    %v204 = vunpack.c.l.b16 %v168
    %v205 = vunpack.c.l.b16 %v169
    %v206 = vunpack.c.l.b16 %v170
    %v207 = vunpack.c.l.b16 %v171
    %v208 = vunpack.c.l.b16 %v172
    %v209 = vunpack.c.l.b16 %v173
    %v210 = vunpack.c.l.b16 %v174
    %v211 = vpack.c.b16 %v196, %v195
    %v212 = vpack.c.b16 %v198, %v197
    %v213 = vpack.c.b16 %v200, %v199
    %v214 = vpack.c.b16 %v202, %v201
    %v215 = vpack.c.b16 %v204, %v203
    %v216 = vpack.c.b16 %v206, %v205
    %v217 = vpack.c.b16 %v208, %v207
    %v218 = vpack.c.b16 %v210, %v209
    %227 = vmatpush.bf16.msra.mxu0 %v218
    %228 = vmatpush.bf16.msra.mxu0 %v217
    %229 = vmatpush.bf16.msra.mxu0 %v216
    %230 = vmatpush.bf16.msra.mxu0 %v215
    %231 = vmatpush.bf16.msra.mxu0 %v214
    %232 = vmatpush.bf16.msra.mxu0 %v213
    %233 = vmatpush.bf16.msra.mxu0 %v212
    %234 = vmatpush.bf16.msra.mxu0 %v211
    %235 = vmatmul.bf16.gmra.mxu0 %v158
    %v236 = vpop.f32.mrf.mxu0
    %v237 = vadd.f32 %v177, %v236
    %v238 = vpop.f32.mrf.mxu0
    %239 = vdwg.mxu0
    %v240 = vmax.f32 %v237, 0.0
    %v241 = vpack.c.bf16 %v240, %v240
    %v242 = vld [vmem:[#allocation7] sm:$0xf]
    %v243 = vld [vmem:[#allocation7 + $0x4] sm:$0xf]
    %v244 = vld [vmem:[#allocation7 + $0x8] sm:$0xf]
    %v245 = vld [vmem:[#allocation7 + $0xc] sm:$0xf]
    %v246 = vld [vmem:[#allocation7 + $0x10] sm:$0xf]
    %v247 = vld [vmem:[#allocation7 + $0x14] sm:$0xf]
    %v248 = vld [vmem:[#allocation7 + $0x18] sm:$0xf]
    %v249 = vld [vmem:[#allocation7 + $0x1c] sm:$0xf]
    %v250 = vld [vmem:[#allocation7 + $0x20] sm:$0xf]
    %v251 = vld [vmem:[#allocation7 + $0x24] sm:$0xf]
    %v252 = vld [vmem:[#allocation7 + $0x28] sm:$0xf]
    %v253 = vld [vmem:[#allocation7 + $0x2c] sm:$0xf]
    %v254 = vld [vmem:[#allocation7 + $0x30] sm:$0xf]
    %v255 = vld [vmem:[#allocation7 + $0x34] sm:$0xf]
    %v256 = vld [vmem:[#allocation7 + $0x38] sm:$0xf]
    %v257 = vld [vmem:[#allocation7 + $0x3c] sm:$0xf]
    %v258 = vld [vmem:[%s6] sm:$0x1]
    %v260 = vperm.slane %v258, 0
    %v278 = vunpack.c.l.b16 %v242
    %v279 = vunpack.c.l.b16 %v243
    %v280 = vunpack.c.l.b16 %v244
    %v281 = vunpack.c.l.b16 %v245
    %v282 = vunpack.c.l.b16 %v246
    %v283 = vunpack.c.l.b16 %v247
    %v284 = vunpack.c.l.b16 %v248
    %v285 = vunpack.c.l.b16 %v249
    %v286 = vunpack.c.l.b16 %v250
    %v287 = vunpack.c.l.b16 %v251
    %v288 = vunpack.c.l.b16 %v252
    %v289 = vunpack.c.l.b16 %v253
    %v290 = vunpack.c.l.b16 %v254
    %v291 = vunpack.c.l.b16 %v255
    %v292 = vunpack.c.l.b16 %v256
    %v293 = vunpack.c.l.b16 %v257
    %v294 = vpack.c.b16 %v279, %v278
    %v295 = vpack.c.b16 %v281, %v280
    %v296 = vpack.c.b16 %v283, %v282
    %v297 = vpack.c.b16 %v285, %v284
    %v298 = vpack.c.b16 %v287, %v286
    %v299 = vpack.c.b16 %v289, %v288
    %v300 = vpack.c.b16 %v291, %v290
    %v301 = vpack.c.b16 %v293, %v292
    %310 = vmatpush.bf16.msra.mxu0 %v301
    %311 = vmatpush.bf16.msra.mxu0 %v300
    %312 = vmatpush.bf16.msra.mxu0 %v299
    %313 = vmatpush.bf16.msra.mxu0 %v298
    %314 = vmatpush.bf16.msra.mxu0 %v297
    %315 = vmatpush.bf16.msra.mxu0 %v296
    %316 = vmatpush.bf16.msra.mxu0 %v295
    %317 = vmatpush.bf16.msra.mxu0 %v294
    %318 = vmatmul.bf16.gmra.mxu0 %v241
    %v319 = vpop.f32.mrf.mxu0
    %v320 = vadd.f32 %v260, %v319
    %v321 = vpop.f32.mrf.mxu0
    %322 = vdwg.mxu0
    %323 = vst [vmem:[#allocation8] sm:$0xff] %v320
    // Predicated region
    $region42: #{translation_module_forward.1} parent=1 // pred_check
      _
    $region43: #{translation_module_forward.1} parent=1 // pred_check_branch
      %325 = sbr.rel (0) target = $region45
    $region44: #{translation_module_forward.1} parent=1 // pred_region
      %327 = vsyncadd [#allocation4], 0
      %s329 = sshll.u32 [#allocation8], 4
      %s330 = int_to_ptr.vmem [resolvable:$true] %s329
      %s331 = sshll.u32 %s7, 4
      %s332 = int_to_ptr.hbm [resolvable:$true] %s331
      %334 = dma.vmem_to_hbm [thread:$0]  %s330, 128, %s332, [#allocation4]
    $region45: #{translation_module_forward.1} parent=1 // pred_fallthru
      _
    // Predicated region
    $region46: #{translation_module_forward.1} parent=1 // pred_check
      _
    $region47: #{translation_module_forward.1} parent=1 // pred_check_branch
      %336 = sbr.rel (0) target = $region49
    $region48: #{translation_module_forward.1} parent=1 // pred_region
      %338 = dma.done [#allocation4], 128
    $region49: #{translation_module_forward.1} parent=1 // pred_fallthru
      _
    %339 = vsyncpa [#allocation3], 1
    %340 = vsyncpa [#allocation6], 1
    %341 = vsyncpa [#allocation4], 1

// kernel: translation_module_forward.1
$region0: #{translation_module_forward.1}
  #allocation0 [shape = 'u32[]', space=smem, size = 0x4, offset = 0x4, fixed_abs, tag = 'smem constant byte address 0x4 - core index']
  #allocation1 [shape = 'u32[72,128]{1,0:T(1,128)}', space=vmem, size = 0x9000, scoped, tag = 'internal scratch']
  %s0 = inlined_call_operand.vmem [shape: f32[8,128], index: 0, kind: input, shape index: {}]
  %s1 = inlined_call_operand.hbm [shape: bf16[128,128], index: 1, kind: input, shape index: {}]
  %s2 = inlined_call_operand.vmem [shape: f32[1,128], index: 2, kind: input, shape index: {}]
  %s3 = inlined_call_operand.hbm [shape: bf16[128,128], index: 3, kind: input, shape index: {}]
  %s4 = inlined_call_operand.vmem [shape: f32[1,128], index: 4, kind: input, shape index: {}]
  %s5 = inlined_call_operand.hbm [shape: bf16[128,128], index: 5, kind: input, shape index: {}]
  %s6 = inlined_call_operand.vmem [shape: f32[1,128], index: 6, kind: input, shape index: {}]
  %s7 = inlined_call_operand.hbm [shape: f32[8,128], index: 7, kind: output, shape index: {}]
  %s8 = sld [smem:[#allocation0]]
  $region50: #{translation_module_forward.1} parent=0
    _
  %s10 = ssub.s32 1, %s8
  %s11 = scalar_select 0, %s10, %s8
  $region1: #{translation_module_forward.1} parent=0
    #allocation2 [shape = 'u8[32768]{0}', space=vmem, size = 0x8000, scoped, tag = 'input window, operand 1, single buffered']
    #allocation3 [shape = 's32[1]{0}', space=sflag, size = 0x4, scoped, tag = 'scoped memory for translation_module_forward.1']
    #allocation4 [shape = 's32[1]{0}', space=sflag, size = 0x4, scoped, tag = 'scoped memory for translation_module_forward.1']
    #allocation5 [shape = 'u8[32768]{0}', space=vmem, size = 0x8000, scoped, tag = 'input window, operand 3, single buffered']
    #allocation6 [shape = 's32[1]{0}', space=sflag, size = 0x4, scoped, tag = 'scoped memory for translation_module_forward.1']
    #allocation7 [shape = 'u8[32768]{0}', space=vmem, size = 0x8000, scoped, tag = 'input window, operand 5, single buffered']
    #allocation8 [shape = 'u8[4096]{0}', space=vmem, size = 0x1000, scoped, tag = 'output window, operand 0, single buffered']
    %12 = vsyncpa [#allocation3], 0
    %13 = vsyncpa [#allocation6], 0
    %14 = vsyncpa [#allocation4], 0
    // Predicated region
    $region2: #{translation_module_forward.1} parent=1 // pred_check
      _
    $region3: #{translation_module_forward.1} parent=1 // pred_check_branch
      %16 = sbr.rel (0) target = $region5
    $region4: #{translation_module_forward.1} parent=1 // pred_region
      _
    $region5: #{translation_module_forward.1} parent=1 // pred_fallthru
      _
    // Predicated region
    $region6: #{translation_module_forward.1} parent=1 // pred_check
      _
    $region7: #{translation_module_forward.1} parent=1 // pred_check_branch
      %18 = sbr.rel (0) target = $region9
    $region8: #{translation_module_forward.1} parent=1 // pred_region
      %20 = vsyncadd [#allocation3], 0
      %s21 = sshll.u32 %s1, 4
      %s22 = int_to_ptr.hbm [resolvable:$true] %s21
      %s23 = sshll.u32 [#allocation2], 4
      %s24 = int_to_ptr.vmem [resolvable:$true] %s23
      %29 = dma.hbm_to_vmem [thread:$0]  %s22, 1024, %s24, [#allocation3], 64, 64, 4
    $region9: #{translation_module_forward.1} parent=1 // pred_fallthru
      _
    // Predicated region
    $region10: #{translation_module_forward.1} parent=1 // pred_check
      _
    $region11: #{translation_module_forward.1} parent=1 // pred_check_branch
      %31 = sbr.rel (0) target = $region13
    $region12: #{translation_module_forward.1} parent=1 // pred_region
      _
    $region13: #{translation_module_forward.1} parent=1 // pred_fallthru
      _
    // Predicated region
    $region14: #{translation_module_forward.1} parent=1 // pred_check
      _
    $region15: #{translation_module_forward.1} parent=1 // pred_check_branch
      %33 = sbr.rel (0) target = $region17
    $region16: #{translation_module_forward.1} parent=1 // pred_region
      %35 = vsyncadd [#allocation6], 0
      %s36 = sshll.u32 %s3, 4
      %s37 = int_to_ptr.hbm [resolvable:$true] %s36
      %s38 = sshll.u32 [#allocation5], 4
      %s39 = int_to_ptr.vmem [resolvable:$true] %s38
      %44 = dma.hbm_to_vmem [thread:$0]  %s37, 1024, %s39, [#allocation6], 64, 64, 4
    $region17: #{translation_module_forward.1} parent=1 // pred_fallthru
      _
    // Predicated region
    $region18: #{translation_module_forward.1} parent=1 // pred_check
      _
    $region19: #{translation_module_forward.1} parent=1 // pred_check_branch
      %46 = sbr.rel (0) target = $region21
    $region20: #{translation_module_forward.1} parent=1 // pred_region
      _
    $region21: #{translation_module_forward.1} parent=1 // pred_fallthru
      _
    // Predicated region
    $region22: #{translation_module_forward.1} parent=1 // pred_check
      _
    $region23: #{translation_module_forward.1} parent=1 // pred_check_branch
      %48 = sbr.rel (0) target = $region25
    $region24: #{translation_module_forward.1} parent=1 // pred_region
      %50 = vsyncadd [#allocation6], 0
      %s51 = sshll.u32 %s5, 4
      %s52 = int_to_ptr.hbm [resolvable:$true] %s51
      %s53 = sshll.u32 [#allocation7], 4
      %s54 = int_to_ptr.vmem [resolvable:$true] %s53
      %59 = dma.hbm_to_vmem [thread:$0]  %s52, 1024, %s54, [#allocation6], 64, 64, 4
    $region25: #{translation_module_forward.1} parent=1 // pred_fallthru
      _
    // Predicated region
    $region26: #{translation_module_forward.1} parent=1 // pred_check
      _
    $region27: #{translation_module_forward.1} parent=1 // pred_check_branch
      %61 = sbr.rel (0) target = $region29
    $region28: #{translation_module_forward.1} parent=1 // pred_region
      _
    $region29: #{translation_module_forward.1} parent=1 // pred_fallthru
      _
    // Predicated region
    $region30: #{translation_module_forward.1} parent=1 // pred_check
      _
    $region31: #{translation_module_forward.1} parent=1 // pred_check_branch
      %63 = sbr.rel (0) target = $region33
    $region32: #{translation_module_forward.1} parent=1 // pred_region
      %65 = dma.done [#allocation3], 1024
    $region33: #{translation_module_forward.1} parent=1 // pred_fallthru
      _
    // Predicated region
    $region34: #{translation_module_forward.1} parent=1 // pred_check
      _
    $region35: #{translation_module_forward.1} parent=1 // pred_check_branch
      %67 = sbr.rel (0) target = $region37
    $region36: #{translation_module_forward.1} parent=1 // pred_region
      %69 = dma.done [#allocation6], 1024
    $region37: #{translation_module_forward.1} parent=1 // pred_fallthru
      _
    // Predicated region
    $region38: #{translation_module_forward.1} parent=1 // pred_check
      _
    $region39: #{translation_module_forward.1} parent=1 // pred_check_branch
      %71 = sbr.rel (0) target = $region41
    $region40: #{translation_module_forward.1} parent=1 // pred_region
      %73 = dma.done [#allocation6], 1024
    $region41: #{translation_module_forward.1} parent=1 // pred_fallthru
      _
    %v74 = vld [vmem:[%s0] sm:$0xff]
    %v75 = vpack.c.bf16 %v74, %v74
    %v76 = vld [vmem:[#allocation2] sm:$0xf]
    %v77 = vld [vmem:[#allocation2 + $0x4] sm:$0xf]
    %v78 = vld [vmem:[#allocation2 + $0x8] sm:$0xf]
    %v79 = vld [vmem:[#allocation2 + $0xc] sm:$0xf]
    %v80 = vld [vmem:[#allocation2 + $0x10] sm:$0xf]
    %v81 = vld [vmem:[#allocation2 + $0x14] sm:$0xf]
    %v82 = vld [vmem:[#allocation2 + $0x18] sm:$0xf]
    %v83 = vld [vmem:[#allocation2 + $0x1c] sm:$0xf]
    %v84 = vld [vmem:[#allocation2 + $0x20] sm:$0xf]
    %v85 = vld [vmem:[#allocation2 + $0x24] sm:$0xf]
    %v86 = vld [vmem:[#allocation2 + $0x28] sm:$0xf]
    %v87 = vld [vmem:[#allocation2 + $0x2c] sm:$0xf]
    %v88 = vld [vmem:[#allocation2 + $0x30] sm:$0xf]
    %v89 = vld [vmem:[#allocation2 + $0x34] sm:$0xf]
    %v90 = vld [vmem:[#allocation2 + $0x38] sm:$0xf]
    %v91 = vld [vmem:[#allocation2 + $0x3c] sm:$0xf]
    %v92 = vld [vmem:[%s2] sm:$0x1]
    %v94 = vperm.slane %v92, 0
    %v112 = vunpack.c.l.b16 %v76
    %v113 = vunpack.c.l.b16 %v77
    %v114 = vunpack.c.l.b16 %v78
    %v115 = vunpack.c.l.b16 %v79
    %v116 = vunpack.c.l.b16 %v80
    %v117 = vunpack.c.l.b16 %v81
    %v118 = vunpack.c.l.b16 %v82
    %v119 = vunpack.c.l.b16 %v83
    %v120 = vunpack.c.l.b16 %v84
    %v121 = vunpack.c.l.b16 %v85
    %v122 = vunpack.c.l.b16 %v86
    %v123 = vunpack.c.l.b16 %v87
    %v124 = vunpack.c.l.b16 %v88
    %v125 = vunpack.c.l.b16 %v89
    %v126 = vunpack.c.l.b16 %v90
    %v127 = vunpack.c.l.b16 %v91
    %v128 = vpack.c.b16 %v113, %v112
    %v129 = vpack.c.b16 %v115, %v114
    %v130 = vpack.c.b16 %v117, %v116
    %v131 = vpack.c.b16 %v119, %v118
    %v132 = vpack.c.b16 %v121, %v120
    %v133 = vpack.c.b16 %v123, %v122
    %v134 = vpack.c.b16 %v125, %v124
    %v135 = vpack.c.b16 %v127, %v126
    %144 = vmatpush.bf16.msra.mxu0 %v135
    %145 = vmatpush.bf16.msra.mxu0 %v134
    %146 = vmatpush.bf16.msra.mxu0 %v133
    %147 = vmatpush.bf16.msra.mxu0 %v132
    %148 = vmatpush.bf16.msra.mxu0 %v131
    %149 = vmatpush.bf16.msra.mxu0 %v130
    %150 = vmatpush.bf16.msra.mxu0 %v129
    %151 = vmatpush.bf16.msra.mxu0 %v128
    %152 = vmatmul.bf16.gmra.mxu0 %v75
    %v153 = vpop.f32.mrf.mxu0
    %v154 = vadd.f32 %v94, %v153
    %v155 = vpop.f32.mrf.mxu0
    %156 = vdwg.mxu0
    %v157 = vmax.f32 %v154, 0.0
    %v158 = vpack.c.bf16 %v157, %v157
    %v159 = vld [vmem:[#allocation5] sm:$0xf]
    %v160 = vld [vmem:[#allocation5 + $0x4] sm:$0xf]
    %v161 = vld [vmem:[#allocation5 + $0x8] sm:$0xf]
    %v162 = vld [vmem:[#allocation5 + $0xc] sm:$0xf]
    %v163 = vld [vmem:[#allocation5 + $0x10] sm:$0xf]
    %v164 = vld [vmem:[#allocation5 + $0x14] sm:$0xf]
    %v165 = vld [vmem:[#allocation5 + $0x18] sm:$0xf]
    %v166 = vld [vmem:[#allocation5 + $0x1c] sm:$0xf]
    %v167 = vld [vmem:[#allocation5 + $0x20] sm:$0xf]
    %v168 = vld [vmem:[#allocation5 + $0x24] sm:$0xf]
    %v169 = vld [vmem:[#allocation5 + $0x28] sm:$0xf]
    %v170 = vld [vmem:[#allocation5 + $0x2c] sm:$0xf]
    %v171 = vld [vmem:[#allocation5 + $0x30] sm:$0xf]
    %v172 = vld [vmem:[#allocation5 + $0x34] sm:$0xf]
    %v173 = vld [vmem:[#allocation5 + $0x38] sm:$0xf]
    %v174 = vld [vmem:[#allocation5 + $0x3c] sm:$0xf]
    %v175 = vld [vmem:[%s4] sm:$0x1]
    %v177 = vperm.slane %v175, 0
    %v195 = vunpack.c.l.b16 %v159
    %v196 = vunpack.c.l.b16 %v160
    %v197 = vunpack.c.l.b16 %v161
    %v198 = vunpack.c.l.b16 %v162
    %v199 = vunpack.c.l.b16 %v163
    %v200 = vunpack.c.l.b16 %v164
    %v201 = vunpack.c.l.b16 %v165
    %v202 = vunpack.c.l.b16 %v166
    %v203 = vunpack.c.l.b16 %v167
    %v204 = vunpack.c.l.b16 %v168
    %v205 = vunpack.c.l.b16 %v169
    %v206 = vunpack.c.l.b16 %v170
    %v207 = vunpack.c.l.b16 %v171
    %v208 = vunpack.c.l.b16 %v172
    %v209 = vunpack.c.l.b16 %v173
    %v210 = vunpack.c.l.b16 %v174
    %v211 = vpack.c.b16 %v196, %v195
    %v212 = vpack.c.b16 %v198, %v197
    %v213 = vpack.c.b16 %v200, %v199
    %v214 = vpack.c.b16 %v202, %v201
    %v215 = vpack.c.b16 %v204, %v203
    %v216 = vpack.c.b16 %v206, %v205
    %v217 = vpack.c.b16 %v208, %v207
    %v218 = vpack.c.b16 %v210, %v209
    %227 = vmatpush.bf16.msra.mxu0 %v218
    %228 = vmatpush.bf16.msra.mxu0 %v217
    %229 = vmatpush.bf16.msra.mxu0 %v216
    %230 = vmatpush.bf16.msra.mxu0 %v215
    %231 = vmatpush.bf16.msra.mxu0 %v214
    %232 = vmatpush.bf16.msra.mxu0 %v213
    %233 = vmatpush.bf16.msra.mxu0 %v212
    %234 = vmatpush.bf16.msra.mxu0 %v211
    %235 = vmatmul.bf16.gmra.mxu0 %v158
    %v236 = vpop.f32.mrf.mxu0
    %v237 = vadd.f32 %v177, %v236
    %v238 = vpop.f32.mrf.mxu0
    %239 = vdwg.mxu0
    %v240 = vmax.f32 %v237, 0.0
    %v241 = vpack.c.bf16 %v240, %v240
    %v242 = vld [vmem:[#allocation7] sm:$0xf]
    %v243 = vld [vmem:[#allocation7 + $0x4] sm:$0xf]
    %v244 = vld [vmem:[#allocation7 + $0x8] sm:$0xf]
    %v245 = vld [vmem:[#allocation7 + $0xc] sm:$0xf]
    %v246 = vld [vmem:[#allocation7 + $0x10] sm:$0xf]
    %v247 = vld [vmem:[#allocation7 + $0x14] sm:$0xf]
    %v248 = vld [vmem:[#allocation7 + $0x18] sm:$0xf]
    %v249 = vld [vmem:[#allocation7 + $0x1c] sm:$0xf]
    %v250 = vld [vmem:[#allocation7 + $0x20] sm:$0xf]
    %v251 = vld [vmem:[#allocation7 + $0x24] sm:$0xf]
    %v252 = vld [vmem:[#allocation7 + $0x28] sm:$0xf]
    %v253 = vld [vmem:[#allocation7 + $0x2c] sm:$0xf]
    %v254 = vld [vmem:[#allocation7 + $0x30] sm:$0xf]
    %v255 = vld [vmem:[#allocation7 + $0x34] sm:$0xf]
    %v256 = vld [vmem:[#allocation7 + $0x38] sm:$0xf]
    %v257 = vld [vmem:[#allocation7 + $0x3c] sm:$0xf]
    %v258 = vld [vmem:[%s6] sm:$0x1]
    %v260 = vperm.slane %v258, 0
    %v278 = vunpack.c.l.b16 %v242
    %v279 = vunpack.c.l.b16 %v243
    %v280 = vunpack.c.l.b16 %v244
    %v281 = vunpack.c.l.b16 %v245
    %v282 = vunpack.c.l.b16 %v246
    %v283 = vunpack.c.l.b16 %v247
    %v284 = vunpack.c.l.b16 %v248
    %v285 = vunpack.c.l.b16 %v249
    %v286 = vunpack.c.l.b16 %v250
    %v287 = vunpack.c.l.b16 %v251
    %v288 = vunpack.c.l.b16 %v252
    %v289 = vunpack.c.l.b16 %v253
    %v290 = vunpack.c.l.b16 %v254
    %v291 = vunpack.c.l.b16 %v255
    %v292 = vunpack.c.l.b16 %v256
    %v293 = vunpack.c.l.b16 %v257
    %v294 = vpack.c.b16 %v279, %v278
    %v295 = vpack.c.b16 %v281, %v280
    %v296 = vpack.c.b16 %v283, %v282
    %v297 = vpack.c.b16 %v285, %v284
    %v298 = vpack.c.b16 %v287, %v286
    %v299 = vpack.c.b16 %v289, %v288
    %v300 = vpack.c.b16 %v291, %v290
    %v301 = vpack.c.b16 %v293, %v292
    %310 = vmatpush.bf16.msra.mxu0 %v301
    %311 = vmatpush.bf16.msra.mxu0 %v300
    %312 = vmatpush.bf16.msra.mxu0 %v299
    %313 = vmatpush.bf16.msra.mxu0 %v298
    %314 = vmatpush.bf16.msra.mxu0 %v297
    %315 = vmatpush.bf16.msra.mxu0 %v296
    %316 = vmatpush.bf16.msra.mxu0 %v295
    %317 = vmatpush.bf16.msra.mxu0 %v294
    %318 = vmatmul.bf16.gmra.mxu0 %v241
    %v319 = vpop.f32.mrf.mxu0
    %v320 = vadd.f32 %v260, %v319
    %v321 = vpop.f32.mrf.mxu0
    %322 = vdwg.mxu0
    %323 = vst [vmem:[#allocation8] sm:$0xff] %v320
    // Predicated region
    $region42: #{translation_module_forward.1} parent=1 // pred_check
      _
    $region43: #{translation_module_forward.1} parent=1 // pred_check_branch
      %325 = sbr.rel (0) target = $region45
    $region44: #{translation_module_forward.1} parent=1 // pred_region
      %327 = vsyncadd [#allocation4], 0
      %s329 = sshll.u32 [#allocation8], 4
      %s330 = int_to_ptr.vmem [resolvable:$true] %s329
      %s331 = sshll.u32 %s7, 4
      %s332 = int_to_ptr.hbm [resolvable:$true] %s331
      %334 = dma.vmem_to_hbm [thread:$0]  %s330, 128, %s332, [#allocation4]
    $region45: #{translation_module_forward.1} parent=1 // pred_fallthru
      _
    // Predicated region
    $region46: #{translation_module_forward.1} parent=1 // pred_check
      _
    $region47: #{translation_module_forward.1} parent=1 // pred_check_branch
      %336 = sbr.rel (0) target = $region49
    $region48: #{translation_module_forward.1} parent=1 // pred_region
      %338 = dma.done [#allocation4], 128
    $region49: #{translation_module_forward.1} parent=1 // pred_fallthru
      _
    %339 = vsyncpa [#allocation3], 1
    %340 = vsyncpa [#allocation6], 1
    %341 = vsyncpa [#allocation4], 1

</llo_original>
